<compile_context>
chip_gen: v5e
topology: v5e:2x2
jax: 0.10.0
libtpu: 0.0.40
codegen_flags: <defaults>
</compile_context>

<pallas_src>
import jax
import jax.numpy as jnp
import numpy as np
from jax.experimental import pallas as pl
from jax.experimental.pallas import tpu as pltpu


def clmmam_kernel(w1t_ref, b1_ref, w2_ref, b2_ref, y_ref, out_ref):
    y = y_ref[...]                                        # (Bt, C, L) f32

    # Global pools over L (lane-axis reductions; keepdims keeps C on sublanes).
    maxp = jnp.max(y, axis=-1, keepdims=True)             # (Bt, C, 1)
    avgp = jnp.mean(y, axis=-1, keepdims=True)            # (Bt, C, 1)

    w1t = w1t_ref[...][None]                              # (1, C, Ch)  w1t[c,j] = W1[j,c]
    w2m = w2_ref[...][None]                               # (1, C, Ch)  w2m[c,j] = W2[c,j]
    b1 = b1_ref[...][None]                                # (1, 1, Ch)
    b2 = b2_ref[...][None]                                # (1, C, 1)

    def mlp(p):                                           # p: (Bt, C, 1)
        # 1x1 conv C -> C/2: contract over the channel (sublane) axis.
        h = jnp.sum(p * w1t, axis=1, keepdims=True) + b1  # (Bt, 1, Ch)
        h = jnp.where(h > 0.0, h, 0.01 * h)               # LeakyReLU(0.01)
        # 1x1 conv C/2 -> C: contract over the hidden (lane) axis.
        return jnp.sum(h * w2m, axis=2, keepdims=True) + b2   # (Bt, C, 1)

    atten = jax.nn.sigmoid(mlp(avgp) + mlp(maxp))         # (Bt, C, 1)

    # atten * Y + Y  ==  Y * (1 + atten); broadcast over the lane (L) axis.
    out_ref[...] = y * (1.0 + atten)


def clmmam_forward(y, w1, b1, w2, b2, *, block_b=None, tile_bytes=4 * 1024 * 1024):
    """y: (B, C, L); w1: (C//2, C, 1); b1: (C//2,); w2: (C, C//2, 1); b2: (C,)."""
    B, C, L = y.shape
    ch = C // 2
    assert w1.shape == (ch, C, 1) and w2.shape == (C, ch, 1)

    # Pre-arrange parameters so the kernel needs no transposes/reshapes.
    w1t = jnp.transpose(w1[:, :, 0])      # (C, ch): w1t[c, j] = W1[j, c]
    w2m = w2[:, :, 0]                     # (C, ch): w2m[c, j] = W2[c, j]
    b1r = b1.reshape(1, ch)
    b2r = b2.reshape(C, 1)

    # Batch-tile selection: largest divisor of B whose (Bt, C, L) f32 tile fits
    # the per-buffer budget. (Softmax-free, but the pools still need full L per
    # row, so we tile over batch only — never over L.)
    if block_b is None:
        bytes_per_b = C * L * y.dtype.itemsize
        block_b = 1
        for d in range(1, B + 1):
            if B % d == 0 and d * bytes_per_b <= tile_bytes:
                block_b = d
    assert B % block_b == 0, "block_b must divide B"
    bt = block_b
    grid = (B // bt,)
    # NOTE(v7x): with 2 TensorCores per chip, prefer grids with >= 2 (even) steps
    # at realistic B; the divisor rule above already yields that for large B.

    out = pl.pallas_call(
        clmmam_kernel,
        out_shape=jax.ShapeDtypeStruct((B, C, L), y.dtype),
        grid_spec=pltpu.PrefetchScalarGridSpec(
            num_scalar_prefetch=0,
            grid=grid,
            in_specs=[
                pl.BlockSpec((C, ch), lambda i: (0, 0)),         # w1t (resident)
                pl.BlockSpec((1, ch), lambda i: (0, 0)),         # b1
                pl.BlockSpec((C, ch), lambda i: (0, 0)),         # w2
                pl.BlockSpec((C, 1), lambda i: (0, 0)),          # b2
                pl.BlockSpec((bt, C, L), lambda i: (i, 0, 0)),   # Y batch tile
            ],
            out_specs=pl.BlockSpec((bt, C, L), lambda i: (i, 0, 0)),
        ),
        compiler_params=pltpu.CompilerParams(
            dimension_semantics=("parallel",),
            vmem_limit_bytes=32 * 1024 * 1024,
        ),
    )(w1t, b1r, w2m, b2r, y)
    return out


def clmmam_ref(y, w1, b1, w2, b2):
    """Pure-JAX reference matching the PyTorch forward."""
    maxp = jnp.max(y, axis=-1, keepdims=True)
    avgp = jnp.mean(y, axis=-1, keepdims=True)

    def atten_path(p):
        h = jnp.einsum("hc,bcx->bhx", w1[:, :, 0], p) + b1[None, :, None]
        h = jnp.where(h > 0.0, h, 0.01 * h)
        return jnp.einsum("ch,bhx->bcx", w2[:, :, 0], h) + b2[None, :, None]

    atten = jax.nn.sigmoid(atten_path(avgp) + atten_path(maxp))
    return atten * y + y


if __name__ == "__main__":
    key = jax.random.PRNGKey(0)
    k1, k2, k3, k4, k5 = jax.random.split(key, 5)

    B, C, L = 4, 16, 128
    ch = C // 2
    y = jax.random.normal(k1, (B, C, L), jnp.float32)

    # Deterministic Conv1d parameters (PyTorch-style uniform bounds).
    bound1 = 1.0 / np.sqrt(C * 1)
    w1 = jax.random.uniform(k2, (ch, C, 1), jnp.float32, -bound1, bound1)
    b1 = jax.random.uniform(k3, (ch,), jnp.float32, -bound1, bound1)
    bound2 = 1.0 / np.sqrt(ch * 1)
    w2 = jax.random.uniform(k4, (C, ch, 1), jnp.float32, -bound2, bound2)
    b2 = jax.random.uniform(k5, (C,), jnp.float32, -bound2, bound2)

    # block_b=2 -> 2 batch elements per grid step, 2-step pipelined grid.
    out = clmmam_forward(y, w1, b1, w2, b2, block_b=2)
    jax.block_until_ready(out)

    out_r = clmmam_ref(y, w1, b1, w2, b2)
    np.testing.assert_allclose(np.asarray(out), np.asarray(out_r), rtol=1e-5, atol=1e-5)

    print("KERNEL_OK")
</pallas_src>

<mosaic_0001>
module attributes {stable_mosaic.version = 11 : i64} {
  func.func @clmmam_kernel(%arg0: i32, %arg1: memref<16x8xf32, #tpu.memory_space<vmem>>, %arg2: memref<1x8xf32, #tpu.memory_space<vmem>>, %arg3: memref<16x8xf32, #tpu.memory_space<vmem>>, %arg4: memref<16x1xf32, #tpu.memory_space<vmem>>, %arg5: memref<2x16x128xf32, #tpu.memory_space<vmem>>, %arg6: memref<2x16x128xf32, #tpu.memory_space<vmem>>) attributes {dimension_semantics = [#tpu.dimension_semantics<parallel>], iteration_bounds = array<i64: 2>, scalar_prefetch = 0 : i64, scratch_operands = 0 : i64, tpu.core_type = #tpu.core_type<tc>, window_params = [{pipeline_mode = #tpu.pipeline_mode<synchronous>, transform_indices = @transform_0, window_bounds = array<i64: 16, 8>}, {pipeline_mode = #tpu.pipeline_mode<synchronous>, transform_indices = @transform_1, window_bounds = array<i64: 1, 8>}, {pipeline_mode = #tpu.pipeline_mode<synchronous>, transform_indices = @transform_2, window_bounds = array<i64: 16, 8>}, {pipeline_mode = #tpu.pipeline_mode<synchronous>, transform_indices = @transform_3, window_bounds = array<i64: 16, 1>}, {transform_indices = @transform_4, window_bounds = array<i64: 2, 16, 128>}, {transform_indices = @transform_5, window_bounds = array<i64: 2, 16, 128>}]} {
    %c0 = arith.constant 0 : index
    %c0_0 = arith.constant 0 : index
    %c0_1 = arith.constant 0 : index
    %0 = vector.load %arg5[%c0, %c0_0, %c0_1] : memref<2x16x128xf32, #tpu.memory_space<vmem>>, vector<2x16x128xf32>
    %cst = arith.constant dense<0xFF800000> : vector<2x16xf32>
    %1 = vector.multi_reduction <maximumf>, %0, %cst [2] : vector<2x16x128xf32> to vector<2x16xf32>
    %2 = vector.shape_cast %1 : vector<2x16xf32> to vector<2x16x1xf32>
    %cst_2 = arith.constant dense<0.000000e+00> : vector<2x16xf32>
    %3 = vector.multi_reduction <add>, %0, %cst_2 [2] : vector<2x16x128xf32> to vector<2x16xf32>
    %4 = vector.shape_cast %3 : vector<2x16xf32> to vector<2x16x1xf32>
    %cst_3 = arith.constant 1.280000e+02 : f32
    %5 = vector.broadcast %cst_3 : f32 to vector<2x16x1xf32>
    %6 = arith.divf %4, %5 : vector<2x16x1xf32>
    %c0_4 = arith.constant 0 : index
    %c0_5 = arith.constant 0 : index
    %7 = vector.load %arg1[%c0_4, %c0_5] : memref<16x8xf32, #tpu.memory_space<vmem>>, vector<16x8xf32>
    %8 = vector.shape_cast %7 : vector<16x8xf32> to vector<1x16x8xf32>
    %c0_6 = arith.constant 0 : index
    %c0_7 = arith.constant 0 : index
    %9 = vector.load %arg3[%c0_6, %c0_7] : memref<16x8xf32, #tpu.memory_space<vmem>>, vector<16x8xf32>
    %10 = vector.shape_cast %9 : vector<16x8xf32> to vector<1x16x8xf32>
    %c0_8 = arith.constant 0 : index
    %c0_9 = arith.constant 0 : index
    %11 = vector.load %arg2[%c0_8, %c0_9] : memref<1x8xf32, #tpu.memory_space<vmem>>, vector<1x8xf32>
    %12 = vector.shape_cast %11 : vector<1x8xf32> to vector<1x1x8xf32>
    %c0_10 = arith.constant 0 : index
    %c0_11 = arith.constant 0 : index
    %13 = vector.load %arg4[%c0_10, %c0_11] : memref<16x1xf32, #tpu.memory_space<vmem>>, vector<16x1xf32>
    %14 = vector.shape_cast %13 : vector<16x1xf32> to vector<1x16x1xf32>
    %15 = vector.broadcast %6 : vector<2x16x1xf32> to vector<2x16x8xf32>
    %16 = vector.broadcast %8 : vector<1x16x8xf32> to vector<2x16x8xf32>
    %17 = arith.mulf %15, %16 : vector<2x16x8xf32>
    %cst_12 = arith.constant dense<0.000000e+00> : vector<2x8xf32>
    %18 = vector.multi_reduction <add>, %17, %cst_12 [1] : vector<2x16x8xf32> to vector<2x8xf32>
    %19 = vector.shape_cast %18 : vector<2x8xf32> to vector<2x1x8xf32>
    %20 = vector.broadcast %12 : vector<1x1x8xf32> to vector<2x1x8xf32>
    %21 = arith.addf %19, %20 : vector<2x1x8xf32>
    %cst_13 = arith.constant 0.000000e+00 : f32
    %22 = vector.broadcast %cst_13 : f32 to vector<2x1x8xf32>
    %23 = arith.cmpf ogt, %21, %22 : vector<2x1x8xf32>
    %cst_14 = arith.constant 0.00999999977 : f32
    %24 = vector.broadcast %cst_14 : f32 to vector<2x1x8xf32>
    %25 = arith.mulf %24, %21 : vector<2x1x8xf32>
    %26 = arith.select %23, %21, %25 : vector<2x1x8xi1>, vector<2x1x8xf32>
    %27 = vector.broadcast %26 : vector<2x1x8xf32> to vector<2x16x8xf32>
    %28 = vector.broadcast %10 : vector<1x16x8xf32> to vector<2x16x8xf32>
    %29 = arith.mulf %27, %28 : vector<2x16x8xf32>
    %cst_15 = arith.constant dense<0.000000e+00> : vector<2x16xf32>
    %30 = vector.multi_reduction <add>, %29, %cst_15 [2] : vector<2x16x8xf32> to vector<2x16xf32>
    %31 = vector.shape_cast %30 : vector<2x16xf32> to vector<2x16x1xf32>
    %32 = vector.broadcast %14 : vector<1x16x1xf32> to vector<2x16x1xf32>
    %33 = arith.addf %31, %32 : vector<2x16x1xf32>
    %34 = vector.broadcast %2 : vector<2x16x1xf32> to vector<2x16x8xf32>
    %35 = vector.broadcast %8 : vector<1x16x8xf32> to vector<2x16x8xf32>
    %36 = arith.mulf %34, %35 : vector<2x16x8xf32>
    %cst_16 = arith.constant dense<0.000000e+00> : vector<2x8xf32>
    %37 = vector.multi_reduction <add>, %36, %cst_16 [1] : vector<2x16x8xf32> to vector<2x8xf32>
    %38 = vector.shape_cast %37 : vector<2x8xf32> to vector<2x1x8xf32>
    %39 = vector.broadcast %12 : vector<1x1x8xf32> to vector<2x1x8xf32>
    %40 = arith.addf %38, %39 : vector<2x1x8xf32>
    %cst_17 = arith.constant 0.000000e+00 : f32
    %41 = vector.broadcast %cst_17 : f32 to vector<2x1x8xf32>
    %42 = arith.cmpf ogt, %40, %41 : vector<2x1x8xf32>
    %cst_18 = arith.constant 0.00999999977 : f32
    %43 = vector.broadcast %cst_18 : f32 to vector<2x1x8xf32>
    %44 = arith.mulf %43, %40 : vector<2x1x8xf32>
    %45 = arith.select %42, %40, %44 : vector<2x1x8xi1>, vector<2x1x8xf32>
    %46 = vector.broadcast %45 : vector<2x1x8xf32> to vector<2x16x8xf32>
    %47 = vector.broadcast %10 : vector<1x16x8xf32> to vector<2x16x8xf32>
    %48 = arith.mulf %46, %47 : vector<2x16x8xf32>
    %cst_19 = arith.constant dense<0.000000e+00> : vector<2x16xf32>
    %49 = vector.multi_reduction <add>, %48, %cst_19 [2] : vector<2x16x8xf32> to vector<2x16xf32>
    %50 = vector.shape_cast %49 : vector<2x16xf32> to vector<2x16x1xf32>
    %51 = vector.broadcast %14 : vector<1x16x1xf32> to vector<2x16x1xf32>
    %52 = arith.addf %50, %51 : vector<2x16x1xf32>
    %53 = arith.addf %33, %52 : vector<2x16x1xf32>
    %54 = arith.negf %53 : vector<2x16x1xf32>
    %55 = math.exp %54 : vector<2x16x1xf32>
    %cst_20 = arith.constant 1.000000e+00 : f32
    %56 = vector.broadcast %cst_20 : f32 to vector<2x16x1xf32>
    %57 = arith.addf %56, %55 : vector<2x16x1xf32>
    %58 = arith.divf %56, %57 : vector<2x16x1xf32>
    %cst_21 = arith.constant 1.000000e+00 : f32
    %59 = vector.broadcast %cst_21 : f32 to vector<2x16x1xf32>
    %60 = arith.addf %59, %58 : vector<2x16x1xf32>
    %61 = vector.broadcast %60 : vector<2x16x1xf32> to vector<2x16x128xf32>
    %62 = arith.mulf %0, %61 : vector<2x16x128xf32>
    %c0_22 = arith.constant 0 : index
    %c0_23 = arith.constant 0 : index
    %c0_24 = arith.constant 0 : index
    %63 = vector.load %arg6[%c0_22, %c0_23, %c0_24] : memref<2x16x128xf32, #tpu.memory_space<vmem>>, vector<2x16x128xf32>
    tpu.vector_store %arg6[%c0_22, %c0_23, %c0_24], %62 {strides = array<i32>} : memref<2x16x128xf32, #tpu.memory_space<vmem>>, vector<2x16x128xf32>,
    return
  }
  func.func @transform_0(%arg0: i32) -> (i32, i32) {
    %c0_i32 = arith.constant 0 : i32
    %c0_i32_0 = arith.constant 0 : i32
    %c0_i32_1 = arith.constant 0 : i32
    return %c0_i32, %c0_i32_0 : i32, i32
  }
  func.func @transform_1(%arg0: i32) -> (i32, i32) {
    %c0_i32 = arith.constant 0 : i32
    %c0_i32_0 = arith.constant 0 : i32
    %c0_i32_1 = arith.constant 0 : i32
    return %c0_i32, %c0_i32_0 : i32, i32
  }
  func.func @transform_2(%arg0: i32) -> (i32, i32) {
    %c0_i32 = arith.constant 0 : i32
    %c0_i32_0 = arith.constant 0 : i32
    %c0_i32_1 = arith.constant 0 : i32
    return %c0_i32, %c0_i32_0 : i32, i32
  }
  func.func @transform_3(%arg0: i32) -> (i32, i32) {
    %c0_i32 = arith.constant 0 : i32
    %c0_i32_0 = arith.constant 0 : i32
    %c0_i32_1 = arith.constant 0 : i32
    return %c0_i32, %c0_i32_0 : i32, i32
  }
  func.func @transform_4(%arg0: i32) -> (i32, i32, i32) {
    %c0_i32 = arith.constant 0 : i32
    %c0_i32_0 = arith.constant 0 : i32
    %c0_i32_1 = arith.constant 0 : i32
    return %arg0, %c0_i32, %c0_i32_0 : i32, i32, i32
  }
  func.func @transform_5(%arg0: i32) -> (i32, i32, i32) {
    %c0_i32 = arith.constant 0 : i32
    %c0_i32_0 = arith.constant 0 : i32
    %c0_i32_1 = arith.constant 0 : i32
    return %arg0, %c0_i32, %c0_i32_0 : i32, i32, i32
  }
}

</mosaic_0001>

<llo_original>
// kernel: tpu_custom_call.1
$region0: #{tpu_custom_call.1}
  #allocation0 [shape = 'u32[]', space=smem, size = 0x4, offset = 0x4, fixed_abs, tag = 'smem constant byte address 0x4 - core index']
  #allocation1 [shape = 'u32[72,128]{1,0:T(1,128)}', space=vmem, size = 0x9000, scoped, tag = 'internal scratch']
  %s0 = inlined_call_operand.vmem [shape: f32[16,8], index: 0, kind: input, shape index: {}]
  %s1 = inlined_call_operand.vmem [shape: f32[1,8], index: 1, kind: input, shape index: {}]
  %s2 = inlined_call_operand.vmem [shape: f32[16,8], index: 2, kind: input, shape index: {}]
  %s3 = inlined_call_operand.vmem [shape: f32[16,1], index: 3, kind: input, shape index: {}]
  %s4 = inlined_call_operand.hbm [shape: f32[4,16,128], index: 4, kind: input, shape index: {}]
  %s5 = inlined_call_operand.hbm [shape: f32[4,16,128], index: 5, kind: output, shape index: {}]
  %s6 = sld [smem:[#allocation0]]
  $region57: #{tpu_custom_call.1} parent=0
    _
  %s8 = ssub.s32 1, %s6
  %s9 = scalar_select 0, %s8, %s6
  $region1: #{tpu_custom_call.1} parent=0
    #allocation2 [shape = 'u8[32768]{0}', space=vmem, size = 0x8000, scoped, tag = 'input window, operand 4']
    #allocation3 [shape = 's32[2]{0}', space=sflag, size = 0x8, scoped, tag = 'scoped memory for tpu_custom_call.1']
    #allocation4 [shape = 's32[2]{0}', space=sflag, size = 0x8, scoped, tag = 'scoped memory for tpu_custom_call.1']
    #allocation5 [shape = 'u8[32768]{0}', space=vmem, size = 0x8000, scoped, tag = 'output window, operand 0']
    %10 = vsyncpa [#allocation3], 0
    %s11 = scalar_lea.sflag [#allocation3], 1
    %12 = vsyncpa %s11, 0
    %13 = vsyncpa [#allocation4], 0
    %s14 = scalar_lea.sflag [#allocation4], 1
    %15 = vsyncpa %s14, 0
    loop: start=0, step=1, limit=4
    $region2: #{tpu_custom_call.1} parent=1 // loop_pre_header
      _
    $region3: #{tpu_custom_call.1} parent=1 // loop_header
      %s17 = sphi 0, %s21
      %p18 = scmp.ge.s32.totalorder %s17, 4
      %s25 = sphi 0, %s25
      %s27 = sphi 0, %s25
      %s28 = sphi 0, %s27
      %s42 = sphi 0, %s28
      %s46 = sphi 0, %s46
      %s48 = sphi 0, %s46
      %s49 = sphi 0, %s48
      %s63 = sphi 0, %s49
      %s67 = sphi 0, %s67
      %s69 = sphi 0, %s67
      %s70 = sphi 0, %s69
      %s84 = sphi 0, %s70
      %s88 = sphi 0, %s88
      %s90 = sphi 0, %s88
      %s91 = sphi 0, %s90
      %s105 = sphi 0, %s91
      %s111 = sphi 0, %s113
      %s114 = sphi 0, %s111
      %s115 = sphi 0, %s114
      %s131 = sphi 0, %s115
      %s137 = sphi 0, %s139
      %s140 = sphi 0, %s137
      %s141 = sphi 0, %s140
      %s157 = sphi 0, %s141
    $region4: #{tpu_custom_call.1} parent=1 // loop_header_branch
      %20 = sbr.rel (%p18) target = $region8
    $region5: #{tpu_custom_call.1} parent=1 // loop_body
      %s22 = ssub.s32 %s17, 1
      %s23 = ssub.s32 %s17, 2
      %s24 = sadd.s32 %s17, 1
      %s26 = sadd.s32 %s25, 1
      %p29 = scmp.eq.s32.totalorder %s17, 1
      %p30 = scmp.ne.s32.totalorder %s25, %s27
      %p31 = scmp.eq.s32.totalorder %s17, 0
      %p32 = por %p30, %p31
      %p33 = scmp.ne.s32.totalorder %s25, %s27
      %p34 = scmp.eq.s32.totalorder %s22, 1
      %p35 = por %p33, %p34
      %p36 = scmp.ne.s32.totalorder %s27, %s28
      %p37 = scmp.eq.s32.totalorder %s22, 0
      %p38 = por %p36, %p37
      %p39 = scmp.ne.s32.totalorder %s27, %s28
      %p40 = scmp.eq.s32.totalorder %s23, 1
      %p41 = por %p39, %p40
      %p43 = scmp.ne.s32.totalorder %s28, %s42
      %p44 = scmp.eq.s32.totalorder %s23, 0
      %p45 = por %p43, %p44
      %s47 = sadd.s32 %s46, 1
      %p50 = scmp.eq.s32.totalorder %s17, 1
      %p51 = scmp.ne.s32.totalorder %s46, %s48
      %p52 = scmp.eq.s32.totalorder %s17, 0
      %p53 = por %p51, %p52
      %p54 = scmp.ne.s32.totalorder %s46, %s48
      %p55 = scmp.eq.s32.totalorder %s22, 1
      %p56 = por %p54, %p55
      %p57 = scmp.ne.s32.totalorder %s48, %s49
      %p58 = scmp.eq.s32.totalorder %s22, 0
      %p59 = por %p57, %p58
      %p60 = scmp.ne.s32.totalorder %s48, %s49
      %p61 = scmp.eq.s32.totalorder %s23, 1
      %p62 = por %p60, %p61
      %p64 = scmp.ne.s32.totalorder %s49, %s63
      %p65 = scmp.eq.s32.totalorder %s23, 0
      %p66 = por %p64, %p65
      %s68 = sadd.s32 %s67, 1
      %p71 = scmp.eq.s32.totalorder %s17, 1
      %p72 = scmp.ne.s32.totalorder %s67, %s69
      %p73 = scmp.eq.s32.totalorder %s17, 0
      %p74 = por %p72, %p73
      %p75 = scmp.ne.s32.totalorder %s67, %s69
      %p76 = scmp.eq.s32.totalorder %s22, 1
      %p77 = por %p75, %p76
      %p78 = scmp.ne.s32.totalorder %s69, %s70
      %p79 = scmp.eq.s32.totalorder %s22, 0
      %p80 = por %p78, %p79
      %p81 = scmp.ne.s32.totalorder %s69, %s70
      %p82 = scmp.eq.s32.totalorder %s23, 1
      %p83 = por %p81, %p82
      %p85 = scmp.ne.s32.totalorder %s70, %s84
      %p86 = scmp.eq.s32.totalorder %s23, 0
      %p87 = por %p85, %p86
      %s89 = sadd.s32 %s88, 1
      %p92 = scmp.eq.s32.totalorder %s17, 1
      %p93 = scmp.ne.s32.totalorder %s88, %s90
      %p94 = scmp.eq.s32.totalorder %s17, 0
      %p95 = por %p93, %p94
      %p96 = scmp.ne.s32.totalorder %s88, %s90
      %p97 = scmp.eq.s32.totalorder %s22, 1
      %p98 = por %p96, %p97
      %p99 = scmp.ne.s32.totalorder %s90, %s91
      %p100 = scmp.eq.s32.totalorder %s22, 0
      %p101 = por %p99, %p100
      %p102 = scmp.ne.s32.totalorder %s90, %s91
      %p103 = scmp.eq.s32.totalorder %s23, 1
      %p104 = por %p102, %p103
      %p106 = scmp.ne.s32.totalorder %s91, %s105
      %p107 = scmp.eq.s32.totalorder %s23, 0
      %p108 = por %p106, %p107
      %s109 = ssub.s32 %s17, %s24
      %p110 = scmp.eq.s32.totalorder %s109, 0
      %s112 = sadd.s32 %s111, 1
      %s113 = scalar_select %p110, %s111, %s112
      %p116 = pneg %p110
      %p117 = scmp.eq.s32.totalorder %s17, 1
      %p118 = por %p116, %p117
      %p119 = scmp.ne.s32.totalorder %s111, %s114
      %p120 = scmp.eq.s32.totalorder %s17, 0
      %p121 = por %p119, %p120
      %p122 = scmp.ne.s32.totalorder %s111, %s114
      %p123 = scmp.eq.s32.totalorder %s22, 1
      %p124 = por %p122, %p123
      %p125 = scmp.ne.s32.totalorder %s114, %s115
      %p126 = scmp.eq.s32.totalorder %s22, 0
      %p127 = por %p125, %p126
      %p128 = scmp.ne.s32.totalorder %s114, %s115
      %p129 = scmp.eq.s32.totalorder %s23, 1
      %p130 = por %p128, %p129
      %p132 = scmp.ne.s32.totalorder %s115, %s131
      %p133 = scmp.eq.s32.totalorder %s23, 0
      %p134 = por %p132, %p133
      %s135 = ssub.s32 %s17, %s24
      %p136 = scmp.eq.s32.totalorder %s135, 0
      %s138 = sadd.s32 %s137, 1
      %s139 = scalar_select %p136, %s137, %s138
      %p142 = pneg %p136
      %p143 = scmp.eq.s32.totalorder %s17, 1
      %p144 = por %p142, %p143
      %p145 = scmp.ne.s32.totalorder %s137, %s140
      %p146 = scmp.eq.s32.totalorder %s17, 0
      %p147 = por %p145, %p146
      %p148 = scmp.ne.s32.totalorder %s137, %s140
      %p149 = scmp.eq.s32.totalorder %s22, 1
      %p150 = por %p148, %p149
      %p151 = scmp.ne.s32.totalorder %s140, %s141
      %p152 = scmp.eq.s32.totalorder %s22, 0
      %p153 = por %p151, %p152
      %p154 = scmp.ne.s32.totalorder %s140, %s141
      %p155 = scmp.eq.s32.totalorder %s23, 1
      %p156 = por %p154, %p155
      %p158 = scmp.ne.s32.totalorder %s141, %s157
      %p159 = scmp.eq.s32.totalorder %s23, 0
      %p160 = por %p158, %p159
      %p161 = scmp.le.s32.totalorder 1, %s17
      %p162 = scmp.lt.s32.totalorder %s17, 3
      %p163 = pnand %p161, %p162
      %p164 = pneg %p163
      // Predicated region
      $region9: #{tpu_custom_call.1} parent=5 // pred_check
        _
      $region10: #{tpu_custom_call.1} parent=5 // pred_check_branch
        %166 = sbr.rel (%p163) target = $region12
      $region11: #{tpu_custom_call.1} parent=5 // pred_region
        %s167 = ssub.s32 %s17, 1
        // Predicated region
        $region13: #{tpu_custom_call.1} parent=11 // pred_check
          %p168 = pneg %p38
        $region14: #{tpu_custom_call.1} parent=11 // pred_check_branch
          %170 = sbr.rel (%p168) target = $region16
        $region15: #{tpu_custom_call.1} parent=11 // pred_region
          _
        $region16: #{tpu_custom_call.1} parent=11 // pred_fallthru
          _
        // Predicated region
        $region17: #{tpu_custom_call.1} parent=11 // pred_check
          %p171 = pneg %p59
        $region18: #{tpu_custom_call.1} parent=11 // pred_check_branch
          %173 = sbr.rel (%p171) target = $region20
        $region19: #{tpu_custom_call.1} parent=11 // pred_region
          _
        $region20: #{tpu_custom_call.1} parent=11 // pred_fallthru
          _
        // Predicated region
        $region21: #{tpu_custom_call.1} parent=11 // pred_check
          %p174 = pneg %p80
        $region22: #{tpu_custom_call.1} parent=11 // pred_check_branch
          %176 = sbr.rel (%p174) target = $region24
        $region23: #{tpu_custom_call.1} parent=11 // pred_region
          _
        $region24: #{tpu_custom_call.1} parent=11 // pred_fallthru
          _
        // Predicated region
        $region25: #{tpu_custom_call.1} parent=11 // pred_check
          %p177 = pneg %p101
        $region26: #{tpu_custom_call.1} parent=11 // pred_check_branch
          %179 = sbr.rel (%p177) target = $region28
        $region27: #{tpu_custom_call.1} parent=11 // pred_region
          _
        $region28: #{tpu_custom_call.1} parent=11 // pred_fallthru
          _
      $region12: #{tpu_custom_call.1} parent=5 // pred_fallthru
        _
      %p180 = scmp.lt.s32.totalorder %s17, 2
      // Predicated region
      $region29: #{tpu_custom_call.1} parent=5 // pred_check
        %p181 = pneg %p180
      $region30: #{tpu_custom_call.1} parent=5 // pred_check_branch
        %183 = sbr.rel (%p181) target = $region32
      $region31: #{tpu_custom_call.1} parent=5 // pred_region
        // Predicated region
        $region33: #{tpu_custom_call.1} parent=31 // pred_check
          %p184 = pneg %p121
        $region34: #{tpu_custom_call.1} parent=31 // pred_check_branch
          %186 = sbr.rel (%p184) target = $region36
        $region35: #{tpu_custom_call.1} parent=31 // pred_region
          %s187 = sand.u32 %s111, 1
          %s188 = scalar_lea.sflag [#allocation3], %s187
          %s189 = sand.u32 %s111, 1
          %s190 = smul.addr %s189, 32
          %s191 = scalar_lea.vmem [#allocation2], %s190
          %s192 = smul.u32 2, %s17
          %194 = vsyncadd %s188, 0
          %s195 = smul.addr %s192, 2
          %s196 = smul.addr %s195, 8
          %s197 = scalar_lea.hbm %s4, %s196
          %s198 = sshll.u32 %s197, 4
          %s199 = int_to_ptr.hbm [resolvable:$true] %s198
          %s200 = sshll.u32 %s191, 4
          %s201 = int_to_ptr.vmem [resolvable:$true] %s200
          %206 = dma.hbm_to_vmem [thread:$0]  %s199, 512, %s201, %s188, 128, 128, 8
        $region36: #{tpu_custom_call.1} parent=31 // pred_fallthru
          _
      $region32: #{tpu_custom_call.1} parent=5 // pred_fallthru
        _
      %p207 = scmp.le.s32.totalorder 1, %s17
      %p208 = scmp.lt.s32.totalorder %s17, 3
      %p209 = pnand %p207, %p208
      %p210 = pneg %p209
      // Predicated region
      $region37: #{tpu_custom_call.1} parent=5 // pred_check
        _
      $region38: #{tpu_custom_call.1} parent=5 // pred_check_branch
        %212 = sbr.rel (%p209) target = $region40
      $region39: #{tpu_custom_call.1} parent=5 // pred_region
        %s213 = ssub.s32 %s17, 1
        %s214 = sand.u32 %s114, 1
        %s215 = scalar_lea.sflag [#allocation3], %s214
        %s216 = sand.u32 %s114, 1
        %s217 = smul.addr %s216, 32
        %s218 = scalar_lea.vmem [#allocation2], %s217
        // Predicated region
        $region41: #{tpu_custom_call.1} parent=39 // pred_check
          %p219 = pneg %p127
        $region42: #{tpu_custom_call.1} parent=39 // pred_check_branch
          %221 = sbr.rel (%p219) target = $region44
        $region43: #{tpu_custom_call.1} parent=39 // pred_region
          %223 = dma.done %s215, 512
        $region44: #{tpu_custom_call.1} parent=39 // pred_fallthru
          _
        %p224 = pneg %p38
        %p225 = pneg %p35
        %p226 = pneg %p59
        %p227 = pneg %p56
        %p228 = pneg %p80
        %p229 = pneg %p77
        %p230 = pneg %p101
        %p231 = pneg %p98
        %s232 = sand.u32 %s114, 1
        %s233 = scalar_lea.sflag [#allocation3], %s232
        %s234 = sand.u32 %s114, 1
        %s235 = smul.addr %s234, 32
        %s236 = scalar_lea.vmem [#allocation2], %s235
        %p237 = pneg %p127
        %p238 = pneg %p124
        %p239 = pneg %p153
        %p240 = pneg %p150
        %s241 = sand.u32 %s140, 1
        %s242 = scalar_lea.sflag [#allocation4], %s241
        %s243 = sand.u32 %s140, 1
        %s244 = smul.addr %s243, 32
        %s245 = scalar_lea.vmem [#allocation5], %s244
        %s246 = smul.u32 2, %s22
        %s247 = smul.u32 2, %s22
        %v248 = vld [vmem:[%s218] sm:$0xff]
        %v249 = vld [vmem:[%s218 + $0x8] sm:$0xff]
        %v250 = vld [vmem:[%s218 + $0x10] sm:$0xff]
        %v251 = vld [vmem:[%s218 + $0x18] sm:$0xff]
        %252 = vmax.xlane.f32.xlu0 %v248
        %v253 = vpop.xlane.xlu0 %252
        %254 = vmax.xlane.f32.xlu0 %v249
        %v255 = vpop.xlane.xlu0 %254
        %256 = vmax.xlane.f32.xlu0 %v250
        %v257 = vpop.xlane.xlu0 %256
        %258 = vmax.xlane.f32.xlu0 %v251
        %v259 = vpop.xlane.xlu0 %258
        %260 = vadd.xlane.f32.xlu0 %v248
        %v261 = vpop.xlane.xlu0 %260
        %262 = vadd.xlane.f32.xlu0 %v249
        %v263 = vpop.xlane.xlu0 %262
        %264 = vadd.xlane.f32.xlu0 %v250
        %v265 = vpop.xlane.xlu0 %264
        %266 = vadd.xlane.f32.xlu0 %v251
        %v267 = vpop.xlane.xlu0 %266
        %v268 = vrcp.pop 128.0
        %v269 = vmul.f32 128.0, %v268
        %v270 = vsub.f32 1.0, %v269
        %v271 = vmul.f32 %v268, %v270
        %v272 = vadd.f32 %v268, %v271
        %vm273 = vweird.f32 %v268
        %v274 = vsel %vm273, %v268, %v272
        %v275 = vmul.f32 %v261, %v274
        %v276 = vmul.f32 %v263, %v274
        %v277 = vmul.f32 %v265, %v274
        %v278 = vmul.f32 %v267, %v274
        %v279 = vld [vmem:[%s0] sm:$0xff]
        %v280 = vld [vmem:[%s0 + $0x8] sm:$0xff]
        %v281 = vld [vmem:[%s2] sm:$0xff]
        %v282 = vld [vmem:[%s2 + $0x8] sm:$0xff]
        %v283 = vld [vmem:[%s1] sm:$0x1]
        %v284 = vld [vmem:[%s3] sm:$0xff]
        %v285 = vld [vmem:[%s3 + $0x8] sm:$0xff]
        %v286 = vmul.f32 %v275, %v279
        %v287 = vmul.f32 %v276, %v280
        %v288 = vmul.f32 %v277, %v279
        %v289 = vmul.f32 %v278, %v280
        %vm290 = vcmask 64512
        %v291 = vsel %vm290, %v286, 0.0
        %v292 = vsel %vm290, %v287, 0.0
        %v293 = vadd.f32 %v291, %v292
        %v294 = vrot.slane %v293, 4
        %v295 = vadd.f32 %v293, %v294
        %v296 = vrot.slane %v295, 2
        %v297 = vadd.f32 %v295, %v296
        %v298 = vrot.slane %v297, 1
        %v299 = vadd.f32 %v297, %v298
        %v300 = vsel %vm290, %v288, 0.0
        %v301 = vsel %vm290, %v289, 0.0
        %v302 = vadd.f32 %v300, %v301
        %v303 = vrot.slane %v302, 4
        %v304 = vadd.f32 %v302, %v303
        %v305 = vrot.slane %v304, 2
        %v306 = vadd.f32 %v304, %v305
        %v307 = vrot.slane %v306, 1
        %v308 = vadd.f32 %v306, %v307
        %v309 = vadd.f32 %v299, %v283
        %v310 = vadd.f32 %v308, %v283
        %vm311 = vcmp.gt.f32.partialorder %v309, 0.0
        %vm312 = vcmp.gt.f32.partialorder %v310, 0.0
        %v313 = vmul.f32 %v309, 0.01
        %v314 = vmul.f32 %v310, 0.01
        %v315 = vsel %vm311, %v309, %v313
        %v316 = vsel %vm312, %v310, %v314
        %v317 = vperm.slane %v315, 0
        %v318 = vperm.slane %v316, 0
        %v319 = vmul.f32 %v317, %v281
        %v320 = vmul.f32 %v317, %v282
        %v321 = vmul.f32 %v318, %v281
        %v322 = vmul.f32 %v318, %v282
        %v323 = vsel %vm290, %v319, 0.0
        %324 = vadd.xlane.f32.xlu0 %v323
        %v325 = vpop.xlane.xlu0 %324
        %v326 = vsel %vm290, %v320, 0.0
        %327 = vadd.xlane.f32.xlu0 %v326
        %v328 = vpop.xlane.xlu0 %327
        %v329 = vsel %vm290, %v321, 0.0
        %330 = vadd.xlane.f32.xlu0 %v329
        %v331 = vpop.xlane.xlu0 %330
        %v332 = vsel %vm290, %v322, 0.0
        %333 = vadd.xlane.f32.xlu0 %v332
        %v334 = vpop.xlane.xlu0 %333
        %v335 = vadd.f32 %v325, %v284
        %v336 = vadd.f32 %v328, %v285
        %v337 = vadd.f32 %v331, %v284
        %v338 = vadd.f32 %v334, %v285
        %v339 = vmul.f32 %v253, %v279
        %v340 = vmul.f32 %v255, %v280
        %v341 = vmul.f32 %v257, %v279
        %v342 = vmul.f32 %v259, %v280
        %v343 = vsel %vm290, %v339, 0.0
        %v344 = vsel %vm290, %v340, 0.0
        %v345 = vadd.f32 %v343, %v344
        %v346 = vrot.slane %v345, 4
        %v347 = vadd.f32 %v345, %v346
        %v348 = vrot.slane %v347, 2
        %v349 = vadd.f32 %v347, %v348
        %v350 = vrot.slane %v349, 1
        %v351 = vadd.f32 %v349, %v350
        %v352 = vsel %vm290, %v341, 0.0
        %v353 = vsel %vm290, %v342, 0.0
        %v354 = vadd.f32 %v352, %v353
        %v355 = vrot.slane %v354, 4
        %v356 = vadd.f32 %v354, %v355
        %v357 = vrot.slane %v356, 2
        %v358 = vadd.f32 %v356, %v357
        %v359 = vrot.slane %v358, 1
        %v360 = vadd.f32 %v358, %v359
        %v361 = vadd.f32 %v351, %v283
        %v362 = vadd.f32 %v360, %v283
        %vm363 = vcmp.gt.f32.partialorder %v361, 0.0
        %vm364 = vcmp.gt.f32.partialorder %v362, 0.0
        %v365 = vmul.f32 %v361, 0.01
        %v366 = vmul.f32 %v362, 0.01
        %v367 = vsel %vm363, %v361, %v365
        %v368 = vsel %vm364, %v362, %v366
        %v369 = vperm.slane %v367, 0
        %v370 = vperm.slane %v368, 0
        %v371 = vmul.f32 %v369, %v281
        %v372 = vmul.f32 %v369, %v282
        %v373 = vmul.f32 %v370, %v281
        %v374 = vmul.f32 %v370, %v282
        %v375 = vsel %vm290, %v371, 0.0
        %376 = vadd.xlane.f32.xlu0 %v375
        %v377 = vpop.xlane.xlu0 %376
        %v378 = vsel %vm290, %v372, 0.0
        %379 = vadd.xlane.f32.xlu0 %v378
        %v380 = vpop.xlane.xlu0 %379
        %v381 = vsel %vm290, %v373, 0.0
        %382 = vadd.xlane.f32.xlu0 %v381
        %v383 = vpop.xlane.xlu0 %382
        %v384 = vsel %vm290, %v374, 0.0
        %385 = vadd.xlane.f32.xlu0 %v384
        %v386 = vpop.xlane.xlu0 %385
        %v387 = vadd.f32 %v377, %v284
        %v388 = vadd.f32 %v380, %v285
        %v389 = vadd.f32 %v383, %v284
        %v390 = vadd.f32 %v386, %v285
        %v391 = vadd.f32 %v335, %v387
        %v392 = vadd.f32 %v336, %v388
        %v393 = vadd.f32 %v337, %v389
        %v394 = vadd.f32 %v338, %v390
        %v395 = vxor.u32 %v391, 2147483648
        %v396 = vxor.u32 %v392, 2147483648
        %v397 = vxor.u32 %v393, 2147483648
        %v398 = vxor.u32 %v394, 2147483648
        %v399 = vmul.f32 %v395, 1.442695
        %v400 = vpow.pop %v399
        %v401 = vmul.f32 %v396, 1.442695
        %v402 = vpow.pop %v401
        %v403 = vmul.f32 %v397, 1.442695
        %v404 = vpow.pop %v403
        %v405 = vmul.f32 %v398, 1.442695
        %v406 = vpow.pop %v405
        %v407 = vadd.f32 %v400, 1.0
        %v408 = vadd.f32 %v402, 1.0
        %v409 = vadd.f32 %v404, 1.0
        %v410 = vadd.f32 %v406, 1.0
        %v411 = vrcp.pop %v407
        %v412 = vmul.f32 %v407, %v411
        %v413 = vsub.f32 1.0, %v412
        %v414 = vmul.f32 %v411, %v413
        %v415 = vadd.f32 %v411, %v414
        %vm416 = vweird.f32 %v407
        %vm417 = vweird.f32 %v411
        %vm418 = vmor %vm416, %vm417
        %v419 = vsel %vm418, %v411, %v415
        %v420 = vand.u32 2147483647, %v407
        %vm421 = vcmp.eq.f32.partialorder %v420, 8.507059e+37
        %v422 = vand.u32 %v407, 2147483648
        %v423 = vor.u32 1.1754944e-38, %v422
        %v424 = vsel %vm421, %v423, %v419
        %v425 = vmul.f32 1.0, %v424
        %v426 = vrcp.pop %v408
        %v427 = vmul.f32 %v408, %v426
        %v428 = vsub.f32 1.0, %v427
        %v429 = vmul.f32 %v426, %v428
        %v430 = vadd.f32 %v426, %v429
        %vm431 = vweird.f32 %v408
        %vm432 = vweird.f32 %v426
        %vm433 = vmor %vm431, %vm432
        %v434 = vsel %vm433, %v426, %v430
        %v435 = vand.u32 2147483647, %v408
        %vm436 = vcmp.eq.f32.partialorder %v435, 8.507059e+37
        %v437 = vand.u32 %v408, 2147483648
        %v438 = vor.u32 1.1754944e-38, %v437
        %v439 = vsel %vm436, %v438, %v434
        %v440 = vmul.f32 1.0, %v439
        %v441 = vrcp.pop %v409
        %v442 = vmul.f32 %v409, %v441
        %v443 = vsub.f32 1.0, %v442
        %v444 = vmul.f32 %v441, %v443
        %v445 = vadd.f32 %v441, %v444
        %vm446 = vweird.f32 %v409
        %vm447 = vweird.f32 %v441
        %vm448 = vmor %vm446, %vm447
        %v449 = vsel %vm448, %v441, %v445
        %v450 = vand.u32 2147483647, %v409
        %vm451 = vcmp.eq.f32.partialorder %v450, 8.507059e+37
        %v452 = vand.u32 %v409, 2147483648
        %v453 = vor.u32 1.1754944e-38, %v452
        %v454 = vsel %vm451, %v453, %v449
        %v455 = vmul.f32 1.0, %v454
        %v456 = vrcp.pop %v410
        %v457 = vmul.f32 %v410, %v456
        %v458 = vsub.f32 1.0, %v457
        %v459 = vmul.f32 %v456, %v458
        %v460 = vadd.f32 %v456, %v459
        %vm461 = vweird.f32 %v410
        %vm462 = vweird.f32 %v456
        %vm463 = vmor %vm461, %vm462
        %v464 = vsel %vm463, %v456, %v460
        %v465 = vand.u32 2147483647, %v410
        %vm466 = vcmp.eq.f32.partialorder %v465, 8.507059e+37
        %v467 = vand.u32 %v410, 2147483648
        %v468 = vor.u32 1.1754944e-38, %v467
        %v469 = vsel %vm466, %v468, %v464
        %v470 = vmul.f32 1.0, %v469
        %v471 = vadd.f32 %v425, 1.0
        %v472 = vadd.f32 %v440, 1.0
        %v473 = vadd.f32 %v455, 1.0
        %v474 = vadd.f32 %v470, 1.0
        %476 = vset.pattern.permute.xlu0 0
        %477 = vperm.xlu0 %476, %v471
        %v478 = vpop.permute.xlu0 %477
        %481 = vset.pattern.permute.xlu0 0
        %482 = vperm.xlu0 %481, %v472
        %v483 = vpop.permute.xlu0 %482
        %486 = vset.pattern.permute.xlu0 0
        %487 = vperm.xlu0 %486, %v473
        %v488 = vpop.permute.xlu0 %487
        %491 = vset.pattern.permute.xlu0 0
        %492 = vperm.xlu0 %491, %v474
        %v493 = vpop.permute.xlu0 %492
        %v495 = vmul.f32 %v248, %v478
        %v496 = vmul.f32 %v249, %v483
        %v497 = vmul.f32 %v250, %v488
        %v498 = vmul.f32 %v251, %v493
        %499 = vst [vmem:[%s245] sm:$0xff] %v495
        %500 = vst [vmem:[%s245 + $0x8] sm:$0xff] %v496
        %501 = vst [vmem:[%s245 + $0x10] sm:$0xff] %v497
        %502 = vst [vmem:[%s245 + $0x18] sm:$0xff] %v498
        %s503 = sand.u32 %s140, 1
        %s504 = scalar_lea.sflag [#allocation4], %s503
        %s505 = sand.u32 %s140, 1
        %s506 = smul.addr %s505, 32
        %s507 = scalar_lea.vmem [#allocation5], %s506
        // Predicated region
        $region45: #{tpu_custom_call.1} parent=39 // pred_check
          %p508 = pneg %p150
        $region46: #{tpu_custom_call.1} parent=39 // pred_check_branch
          %510 = sbr.rel (%p508) target = $region48
        $region47: #{tpu_custom_call.1} parent=39 // pred_region
          %s511 = smul.u32 2, %s22
          %513 = vsyncadd %s504, 0
          %s514 = smul.addr %s511, 2
          %s515 = smul.addr %s514, 8
          %s516 = scalar_lea.hbm %s5, %s515
          %s517 = sshll.u32 %s507, 4
          %s518 = int_to_ptr.vmem [resolvable:$true] %s517
          %s519 = sshll.u32 %s516, 4
          %s520 = int_to_ptr.hbm [resolvable:$true] %s519
          %525 = dma.vmem_to_hbm [thread:$0]  %s518, 512, %s520, %s504, 128, 128, 8
        $region48: #{tpu_custom_call.1} parent=39 // pred_fallthru
          _
      $region40: #{tpu_custom_call.1} parent=5 // pred_fallthru
        _
      %p526 = scmp.le.s32.totalorder 2, %s17
      // Predicated region
      $region49: #{tpu_custom_call.1} parent=5 // pred_check
        %p527 = pneg %p526
      $region50: #{tpu_custom_call.1} parent=5 // pred_check_branch
        %529 = sbr.rel (%p527) target = $region52
      $region51: #{tpu_custom_call.1} parent=5 // pred_region
        %s530 = ssub.s32 %s17, 2
        // Predicated region
        $region53: #{tpu_custom_call.1} parent=51 // pred_check
          %p531 = pneg %p156
        $region54: #{tpu_custom_call.1} parent=51 // pred_check_branch
          %533 = sbr.rel (%p531) target = $region56
        $region55: #{tpu_custom_call.1} parent=51 // pred_region
          %s534 = sand.u32 %s141, 1
          %s535 = scalar_lea.sflag [#allocation4], %s534
          %s536 = sand.u32 %s141, 1
          %s537 = smul.addr %s536, 32
          %s538 = scalar_lea.vmem [#allocation5], %s537
          %540 = dma.done %s535, 512
        $region56: #{tpu_custom_call.1} parent=51 // pred_fallthru
          _
      $region52: #{tpu_custom_call.1} parent=5 // pred_fallthru
        _
    $region6: #{tpu_custom_call.1} parent=1 // loop_footer
      %s21 = sadd.s32 1, %s17
    $region7: #{tpu_custom_call.1} parent=1 // loop_footer_branch
      %16 = sbr.rel target = $region3
    $region8: #{tpu_custom_call.1} parent=1 // loop_exit
      _
    %541 = vsyncpa [#allocation3], 1
    %s542 = scalar_lea.sflag [#allocation3], 1
    %543 = vsyncpa %s542, 1
    %544 = vsyncpa [#allocation4], 1
    %s545 = scalar_lea.sflag [#allocation4], 1
    %546 = vsyncpa %s545, 1

</llo_original>
